<compile_context>
chip_gen: v6e
topology: v6e:2x2x1
jax: 0.10.0
libtpu: 0.0.40
codegen_flags: <defaults>
</compile_context>

<pallas_src>
import numpy as np
import jax
import jax.numpy as jnp
from jax.experimental import pallas as pl
from jax.experimental.pallas import tpu as pltpu

DIRICHLET_ALPHA = 0.5
NUM_CLASSES = 2
CONCENTRATION = NUM_CLASSES * DIRICHLET_ALPHA  # 1.0

_LANE = 1024                       # lanes per folded row (multiple of 128)
_MIN_TILE = 8 * _LANE              # smallest legal tile: 8 sublane rows
_DEFAULT_TILE = 512 * 1024         # samples per grid step (review: 256K-512K)
_VMEM_BUDGET = 28 * 1024 * 1024    # per-step VMEM budget (safe on v7x 64 MiB)


def _round_up(x, m):
    return ((x + m - 1) // m) * m


def _round_down(x, m):
    return (x // m) * m


def _sedf_kernel(sens_ref, pred_ref, diff_ref, out_ref, hire_acc, cnt_acc):
    """One grid step reduces a (G, TR, LANE) int8 membership block and a
    (TR, LANE) prediction block into lane-wide (G, LANE) f32 accumulators.
    The last step folds lanes, applies Dirichlet smoothing and the per-pair
    log-ratio epilogue, and stores the (1, P) result."""
    step = pl.program_id(0)
    num_groups = sens_ref.shape[0]

    @pl.when(step == 0)
    def _init():
        hire_acc[...] = jnp.zeros_like(hire_acc)
        cnt_acc[...] = jnp.zeros_like(cnt_acc)

    # Dense-sublane hot loop: everything below is full (8,128) vregs.
    pred = pred_ref[...].astype(jnp.float32)            # (TR, LANE)
    for g in range(num_groups):                         # static, small G
        m = sens_ref[g].astype(jnp.float32)             # (TR, LANE) 0/1 membership
        row = pl.ds(g, 1)
        hire_acc[row, :] = hire_acc[row, :] + jnp.sum(m * pred, axis=0, keepdims=True)
        cnt_acc[row, :] = cnt_acc[row, :] + jnp.sum(m, axis=0, keepdims=True)

    @pl.when(step == pl.num_programs(0) - 1)
    def _finalize():
        n_hire = jnp.sum(hire_acc[...], axis=1, keepdims=True)   # (G, 1)
        n = jnp.sum(cnt_acc[...], axis=1, keepdims=True)         # (G, 1)
        # Smoothed hire proportion (Dirichlet smoothing), per group.
        prop = (n_hire + DIRICHLET_ALPHA) / (n + CONCENTRATION)
        log_p = jnp.log(prop)
        log_1mp = jnp.log(1.0 - prop)
        # Pair selection via precomputed one-hot difference: diff[:, p] = maj_p - min_p.
        diff = diff_ref[...]                                      # (G, P)
        eps1 = jnp.sum(diff * log_p, axis=0, keepdims=True)       # (1, P)
        eps2 = jnp.sum(diff * log_1mp, axis=0, keepdims=True)     # (1, P)
        out_ref[...] = jnp.maximum(jnp.abs(eps1), jnp.abs(eps2))


def smoothed_empirical_differential_fairness(pred, sensitive, pairs, threshold=None,
                                             tile_samples=None):
    """
    pred        : (N,) or (N, 1) predictions / scores.
    sensitive   : (N, G) dummy-coded sensitive group matrix (NaN = missing).
    pairs       : list of (majority_idx, [minority_idx, ...]) — the SensitiveMap.
    threshold   : optional float; if given, pred is binarized as (pred >= threshold).
    tile_samples: optional override for samples per grid step.
    Returns     : (P,) array, one value per (majority, minority) pair, in order.
    """
    pred = jnp.asarray(pred, jnp.float32).reshape(-1)        # (N,)
    sensitive = jnp.asarray(sensitive, jnp.float32)          # (N, G)
    N, G = sensitive.shape

    # --- SensitiveMap bookkeeping (host glue): flatten pairs into one (G, P)
    # difference matrix so the epilogue is a single broadcast-multiply + reduce.
    maj_rows, min_rows = [], []
    for maj_idx, min_groups in pairs:
        for min_idx in min_groups:
            maj_rows.append(maj_idx)
            min_rows.append(min_idx)
    P = len(maj_rows)
    eye = np.eye(G, dtype=np.float32)
    diff = jnp.asarray((eye[maj_rows] - eye[min_rows]).T)    # (G, P)

    # --- host-side preprocessing: membership as int8 (NaN -> non-member),
    # ThresholdOperator applied here so the kernel never recompiles per threshold.
    # NOTE: for repeated metric calls on the same `sensitive`, cache the int8
    # slab (this transpose/cast reads 4x the kernel's own HBM bytes).
    member_t = (sensitive == 1.0).T.astype(jnp.int8)         # (G, N); NaN -> 0
    if threshold is not None:
        pred_proc = (pred >= threshold).astype(jnp.int8)     # (N,) int8 0/1
        pred_bytes = 1
    else:
        pred_proc = pred                                     # (N,) f32 raw scores
        pred_bytes = 4

    # --- tile sizing: large tiles, budgeted against per-step VMEM usage
    # (double-buffered inputs + in-kernel f32 temporaries) so it is safe on
    # v7x (64 MiB physical VMEM) as well as v5e/v6e.
    per_sample_vmem = 2 * (G + pred_bytes) + 4 * (2 * G + 1)
    budget_tile = max(_MIN_TILE, _round_down(_VMEM_BUDGET // per_sample_vmem, _MIN_TILE))
    tile = _DEFAULT_TILE if tile_samples is None else int(tile_samples)
    tile = max(_MIN_TILE, _round_down(tile, _MIN_TILE))
    tile = min(tile, budget_tile)
    needed = _round_up(max(N, 1), _MIN_TILE)
    tile = min(tile, needed)

    n_pad = _round_up(max(N, 1), tile)
    n_rows = n_pad // _LANE
    tr = tile // _LANE                                       # sublane rows per step

    # --- sublane-dense folded layout: samples fill (rows, LANE) blocks.
    sens3d = jnp.pad(member_t, ((0, 0), (0, n_pad - N))).reshape(G, n_rows, _LANE)
    pred2d = jnp.pad(pred_proc, (0, n_pad - N)).reshape(n_rows, _LANE)

    # Explicit VMEM limit: covers v5e's 16 MiB scoped default, stays well below
    # v7x's 64 MiB physical.
    est_vmem = tile * per_sample_vmem
    vmem_limit = int(min(48 * 2**20, max(32 * 2**20, est_vmem + 8 * 2**20)))

    bytes_accessed = n_pad * (G + pred_bytes) + G * P * 4 + P * 4
    cost = pl.CostEstimate(flops=3 * G * n_pad, transcendentals=2 * G,
                           bytes_accessed=bytes_accessed)

    grid = (n_pad // tile,)
    out = pl.pallas_call(
        _sedf_kernel,
        out_shape=jax.ShapeDtypeStruct((1, P), jnp.float32),
        grid_spec=pltpu.PrefetchScalarGridSpec(
            num_scalar_prefetch=0,
            grid=grid,
            in_specs=[
                pl.BlockSpec((G, tr, _LANE), lambda i: (0, i, 0)),  # int8 membership slab
                pl.BlockSpec((tr, _LANE), lambda i: (i, 0)),        # predictions (int8 or f32)
                pl.BlockSpec((G, P), lambda i: (0, 0)),             # tiny pair-difference matrix
            ],
            out_specs=pl.BlockSpec((1, P), lambda i: (0, 0)),
            scratch_shapes=[
                pltpu.VMEM((G, _LANE), jnp.float32),   # lane-wide n_hire accumulator
                pltpu.VMEM((G, _LANE), jnp.float32),   # lane-wide member-count accumulator
            ],
        ),
        compiler_params=pltpu.CompilerParams(
            dimension_semantics=("arbitrary",),        # reduction axis, shared accumulators
            vmem_limit_bytes=vmem_limit,
        ),
        cost_estimate=cost,
    )(sens3d, pred2d, diff)

    return out.reshape(-1)


def _reference_numpy(pred, sensitive, pairs, threshold=None):
    pred = np.asarray(pred, np.float64).reshape(-1)
    sens = np.asarray(sensitive, np.float64)
    if threshold is not None:
        pred = (pred >= threshold).astype(np.float64)
    out = []
    for maj_idx, min_groups in pairs:
        maj_mask = sens[:, maj_idx] == 1.0
        n_hire_maj = pred[maj_mask].sum()
        n_maj = maj_mask.sum()
        p_maj = (n_hire_maj + DIRICHLET_ALPHA) / (n_maj + CONCENTRATION)
        for min_idx in min_groups:
            min_mask = sens[:, min_idx] == 1.0
            n_hire_min = pred[min_mask].sum()
            n_min = min_mask.sum()
            p_min = (n_hire_min + DIRICHLET_ALPHA) / (n_min + CONCENTRATION)
            e1 = np.log(p_maj) - np.log(p_min)
            e2 = np.log(1 - p_maj) - np.log(1 - p_min)
            out.append(max(abs(e1), abs(e2)))
    return np.array(out, np.float32)


if __name__ == "__main__":
    key = jax.random.PRNGKey(0)
    k_pred, k_a, k_b, k_pred2, k_c, k_d, k_pred3, k_e, k_f = jax.random.split(key, 9)

    pairs = [(0, [1]), (2, [3])]   # two sensitive attributes -> G = 4 columns, P = 2 pairs

    # --- check 1: small thresholded example (single tile, int8 pred path).
    N = 8
    pred = jax.random.uniform(k_pred, (N,), dtype=jnp.float32)
    grp_a = jax.random.bernoulli(k_a, 0.5, (N,)).astype(jnp.float32)
    grp_b = jax.random.bernoulli(k_b, 0.5, (N,)).astype(jnp.float32)
    sensitive = jnp.stack([1.0 - grp_a, grp_a, 1.0 - grp_b, grp_b], axis=1)   # (N, 4)

    result = smoothed_empirical_differential_fairness(pred, sensitive, pairs, threshold=0.5)
    result = jax.block_until_ready(result)
    ref = _reference_numpy(np.asarray(pred), np.asarray(sensitive), pairs, threshold=0.5)
    np.testing.assert_allclose(np.asarray(result), ref, rtol=1e-5, atol=1e-5)

    # --- check 2: raw scores (no threshold, f32 pred path), zero-padded ragged
    # tail, and a NaN row that must be excluded from every group.
    N2 = 700
    pred2 = jax.random.uniform(k_pred2, (N2,), dtype=jnp.float32)
    grp_c = jax.random.bernoulli(k_c, 0.3, (N2,)).astype(jnp.float32)
    grp_d = jax.random.bernoulli(k_d, 0.5, (N2,)).astype(jnp.float32)
    sensitive2 = jnp.stack([1.0 - grp_c, grp_c, 1.0 - grp_d, grp_d], axis=1)  # (N2, 4)
    sensitive2 = sensitive2.at[5, :].set(jnp.nan)

    result2 = smoothed_empirical_differential_fairness(
        pred2, sensitive2, pairs, threshold=None)
    result2 = jax.block_until_ready(result2)
    ref2 = _reference_numpy(np.asarray(pred2), np.asarray(sensitive2), pairs, threshold=None)
    np.testing.assert_allclose(np.asarray(result2), ref2, rtol=1e-5, atol=1e-4)

    # --- check 3: multi-step grid (forced small tile) exercising cross-step
    # accumulator carry + last-step epilogue with a zero-padded tail tile.
    N3 = 20000
    pred3 = jax.random.uniform(k_pred3, (N3,), dtype=jnp.float32)
    grp_e = jax.random.bernoulli(k_e, 0.4, (N3,)).astype(jnp.float32)
    grp_f = jax.random.bernoulli(k_f, 0.6, (N3,)).astype(jnp.float32)
    sensitive3 = jnp.stack([1.0 - grp_e, grp_e, 1.0 - grp_f, grp_f], axis=1)  # (N3, 4)

    result3 = smoothed_empirical_differential_fairness(
        pred3, sensitive3, pairs, threshold=0.3, tile_samples=8192)
    result3 = jax.block_until_ready(result3)
    ref3 = _reference_numpy(np.asarray(pred3), np.asarray(sensitive3), pairs, threshold=0.3)
    np.testing.assert_allclose(np.asarray(result3), ref3, rtol=1e-5, atol=1e-5)

    print("KERNEL_OK")
</pallas_src>

<mosaic_0001>
module attributes {stable_mosaic.version = 11 : i64} {
  func.func @_sedf_kernel(%arg0: i32, %arg1: memref<4x8x1024xi8, #tpu.memory_space<vmem>>, %arg2: memref<8x1024xi8, #tpu.memory_space<vmem>>, %arg3: memref<4x2xf32, #tpu.memory_space<vmem>>, %arg4: memref<1x2xf32, #tpu.memory_space<vmem>>, %arg5: memref<4x1024xf32, #tpu.memory_space<vmem>>, %arg6: memref<4x1024xf32, #tpu.memory_space<vmem>>) attributes {dimension_semantics = [#tpu.dimension_semantics<arbitrary>], iteration_bounds = array<i64: 1>, scalar_prefetch = 0 : i64, scratch_operands = 2 : i64, tpu.core_type = #tpu.core_type<tc>, window_params = [{transform_indices = @transform_0, window_bounds = array<i64: 4, 8, 1024>}, {transform_indices = @transform_1, window_bounds = array<i64: 8, 1024>}, {pipeline_mode = #tpu.pipeline_mode<synchronous>, transform_indices = @transform_2, window_bounds = array<i64: 4, 2>}, {pipeline_mode = #tpu.pipeline_mode<synchronous>, transform_indices = @transform_3, window_bounds = array<i64: 1, 2>}]} {
    %c0_i32 = arith.constant 0 : i32
    %0 = arith.cmpi eq, %arg0, %c0_i32 : i32
    %1 = arith.extui %0 : i1 to i32
    %c0_i32_0 = arith.constant 0 : i32
    %2 = arith.cmpi ne, %1, %c0_i32_0 : i32
    scf.if %2 {
      %cst_52 = arith.constant 0.000000e+00 : f32
      %64 = vector.broadcast %cst_52 : f32 to vector<4x1024xf32>
      %c0_53 = arith.constant 0 : index
      %c0_54 = arith.constant 0 : index
      %65 = vector.load %arg5[%c0_53, %c0_54] : memref<4x1024xf32, #tpu.memory_space<vmem>>, vector<4x1024xf32>
      tpu.vector_store %arg5[%c0_53, %c0_54], %64 {strides = array<i32>} : memref<4x1024xf32, #tpu.memory_space<vmem>>, vector<4x1024xf32>,
      %cst_55 = arith.constant 0.000000e+00 : f32
      %66 = vector.broadcast %cst_55 : f32 to vector<4x1024xf32>
      %c0_56 = arith.constant 0 : index
      %c0_57 = arith.constant 0 : index
      %67 = vector.load %arg6[%c0_56, %c0_57] : memref<4x1024xf32, #tpu.memory_space<vmem>>, vector<4x1024xf32>
      tpu.vector_store %arg6[%c0_56, %c0_57], %66 {strides = array<i32>} : memref<4x1024xf32, #tpu.memory_space<vmem>>, vector<4x1024xf32>,
    } else {
    }
    %c0 = arith.constant 0 : index
    %c0_1 = arith.constant 0 : index
    %3 = vector.load %arg2[%c0, %c0_1] : memref<8x1024xi8, #tpu.memory_space<vmem>>, vector<8x1024xi8>
    %4 = arith.sitofp %3 : vector<8x1024xi8> to vector<8x1024xf32>
    %c0_2 = arith.constant 0 : index
    %c0_3 = arith.constant 0 : index
    %c0_4 = arith.constant 0 : index
    %5 = vector.load %arg1[%c0_2, %c0_3, %c0_4] : memref<4x8x1024xi8, #tpu.memory_space<vmem>>, vector<1x8x1024xi8>
    %6 = vector.shape_cast %5 : vector<1x8x1024xi8> to vector<8x1024xi8>
    %7 = arith.sitofp %6 : vector<8x1024xi8> to vector<8x1024xf32>
    %c0_5 = arith.constant 0 : index
    %c0_6 = arith.constant 0 : index
    %8 = vector.load %arg5[%c0_5, %c0_6] : memref<4x1024xf32, #tpu.memory_space<vmem>>, vector<1x1024xf32>
    %9 = arith.mulf %7, %4 : vector<8x1024xf32>
    %cst = arith.constant dense<0.000000e+00> : vector<1024xf32>
    %10 = vector.multi_reduction <add>, %9, %cst [0] : vector<8x1024xf32> to vector<1024xf32>
    %11 = vector.shape_cast %10 : vector<1024xf32> to vector<1x1024xf32>
    %12 = arith.addf %8, %11 : vector<1x1024xf32>
    %c0_7 = arith.constant 0 : index
    %c0_8 = arith.constant 0 : index
    %13 = vector.load %arg5[%c0_7, %c0_8] : memref<4x1024xf32, #tpu.memory_space<vmem>>, vector<1x1024xf32>
    tpu.vector_store %arg5[%c0_7, %c0_8], %12 {strides = array<i32>} : memref<4x1024xf32, #tpu.memory_space<vmem>>, vector<1x1024xf32>,
    %c0_9 = arith.constant 0 : index
    %c0_10 = arith.constant 0 : index
    %14 = vector.load %arg6[%c0_9, %c0_10] : memref<4x1024xf32, #tpu.memory_space<vmem>>, vector<1x1024xf32>
    %cst_11 = arith.constant dense<0.000000e+00> : vector<1024xf32>
    %15 = vector.multi_reduction <add>, %7, %cst_11 [0] : vector<8x1024xf32> to vector<1024xf32>
    %16 = vector.shape_cast %15 : vector<1024xf32> to vector<1x1024xf32>
    %17 = arith.addf %14, %16 : vector<1x1024xf32>
    %c0_12 = arith.constant 0 : index
    %c0_13 = arith.constant 0 : index
    %18 = vector.load %arg6[%c0_12, %c0_13] : memref<4x1024xf32, #tpu.memory_space<vmem>>, vector<1x1024xf32>
    tpu.vector_store %arg6[%c0_12, %c0_13], %17 {strides = array<i32>} : memref<4x1024xf32, #tpu.memory_space<vmem>>, vector<1x1024xf32>,
    %c1 = arith.constant 1 : index
    %c0_14 = arith.constant 0 : index
    %c0_15 = arith.constant 0 : index
    %19 = vector.load %arg1[%c1, %c0_14, %c0_15] : memref<4x8x1024xi8, #tpu.memory_space<vmem>>, vector<1x8x1024xi8>
    %20 = vector.shape_cast %19 : vector<1x8x1024xi8> to vector<8x1024xi8>
    %21 = arith.sitofp %20 : vector<8x1024xi8> to vector<8x1024xf32>
    %c1_16 = arith.constant 1 : index
    %c0_17 = arith.constant 0 : index
    %22 = vector.load %arg5[%c1_16, %c0_17] : memref<4x1024xf32, #tpu.memory_space<vmem>>, vector<1x1024xf32>
    %23 = arith.mulf %21, %4 : vector<8x1024xf32>
    %cst_18 = arith.constant dense<0.000000e+00> : vector<1024xf32>
    %24 = vector.multi_reduction <add>, %23, %cst_18 [0] : vector<8x1024xf32> to vector<1024xf32>
    %25 = vector.shape_cast %24 : vector<1024xf32> to vector<1x1024xf32>
    %26 = arith.addf %22, %25 : vector<1x1024xf32>
    %c1_19 = arith.constant 1 : index
    %c0_20 = arith.constant 0 : index
    %27 = vector.load %arg5[%c1_19, %c0_20] : memref<4x1024xf32, #tpu.memory_space<vmem>>, vector<1x1024xf32>
    tpu.vector_store %arg5[%c1_19, %c0_20], %26 {strides = array<i32>} : memref<4x1024xf32, #tpu.memory_space<vmem>>, vector<1x1024xf32>,
    %c1_21 = arith.constant 1 : index
    %c0_22 = arith.constant 0 : index
    %28 = vector.load %arg6[%c1_21, %c0_22] : memref<4x1024xf32, #tpu.memory_space<vmem>>, vector<1x1024xf32>
    %cst_23 = arith.constant dense<0.000000e+00> : vector<1024xf32>
    %29 = vector.multi_reduction <add>, %21, %cst_23 [0] : vector<8x1024xf32> to vector<1024xf32>
    %30 = vector.shape_cast %29 : vector<1024xf32> to vector<1x1024xf32>
    %31 = arith.addf %28, %30 : vector<1x1024xf32>
    %c1_24 = arith.constant 1 : index
    %c0_25 = arith.constant 0 : index
    %32 = vector.load %arg6[%c1_24, %c0_25] : memref<4x1024xf32, #tpu.memory_space<vmem>>, vector<1x1024xf32>
    tpu.vector_store %arg6[%c1_24, %c0_25], %31 {strides = array<i32>} : memref<4x1024xf32, #tpu.memory_space<vmem>>, vector<1x1024xf32>,
    %c2 = arith.constant 2 : index
    %c0_26 = arith.constant 0 : index
    %c0_27 = arith.constant 0 : index
    %33 = vector.load %arg1[%c2, %c0_26, %c0_27] : memref<4x8x1024xi8, #tpu.memory_space<vmem>>, vector<1x8x1024xi8>
    %34 = vector.shape_cast %33 : vector<1x8x1024xi8> to vector<8x1024xi8>
    %35 = arith.sitofp %34 : vector<8x1024xi8> to vector<8x1024xf32>
    %c2_28 = arith.constant 2 : index
    %c0_29 = arith.constant 0 : index
    %36 = vector.load %arg5[%c2_28, %c0_29] : memref<4x1024xf32, #tpu.memory_space<vmem>>, vector<1x1024xf32>
    %37 = arith.mulf %35, %4 : vector<8x1024xf32>
    %cst_30 = arith.constant dense<0.000000e+00> : vector<1024xf32>
    %38 = vector.multi_reduction <add>, %37, %cst_30 [0] : vector<8x1024xf32> to vector<1024xf32>
    %39 = vector.shape_cast %38 : vector<1024xf32> to vector<1x1024xf32>
    %40 = arith.addf %36, %39 : vector<1x1024xf32>
    %c2_31 = arith.constant 2 : index
    %c0_32 = arith.constant 0 : index
    %41 = vector.load %arg5[%c2_31, %c0_32] : memref<4x1024xf32, #tpu.memory_space<vmem>>, vector<1x1024xf32>
    tpu.vector_store %arg5[%c2_31, %c0_32], %40 {strides = array<i32>} : memref<4x1024xf32, #tpu.memory_space<vmem>>, vector<1x1024xf32>,
    %c2_33 = arith.constant 2 : index
    %c0_34 = arith.constant 0 : index
    %42 = vector.load %arg6[%c2_33, %c0_34] : memref<4x1024xf32, #tpu.memory_space<vmem>>, vector<1x1024xf32>
    %cst_35 = arith.constant dense<0.000000e+00> : vector<1024xf32>
    %43 = vector.multi_reduction <add>, %35, %cst_35 [0] : vector<8x1024xf32> to vector<1024xf32>
    %44 = vector.shape_cast %43 : vector<1024xf32> to vector<1x1024xf32>
    %45 = arith.addf %42, %44 : vector<1x1024xf32>
    %c2_36 = arith.constant 2 : index
    %c0_37 = arith.constant 0 : index
    %46 = vector.load %arg6[%c2_36, %c0_37] : memref<4x1024xf32, #tpu.memory_space<vmem>>, vector<1x1024xf32>
    tpu.vector_store %arg6[%c2_36, %c0_37], %45 {strides = array<i32>} : memref<4x1024xf32, #tpu.memory_space<vmem>>, vector<1x1024xf32>,
    %c3 = arith.constant 3 : index
    %c0_38 = arith.constant 0 : index
    %c0_39 = arith.constant 0 : index
    %47 = vector.load %arg1[%c3, %c0_38, %c0_39] : memref<4x8x1024xi8, #tpu.memory_space<vmem>>, vector<1x8x1024xi8>
    %48 = vector.shape_cast %47 : vector<1x8x1024xi8> to vector<8x1024xi8>
    %49 = arith.sitofp %48 : vector<8x1024xi8> to vector<8x1024xf32>
    %c3_40 = arith.constant 3 : index
    %c0_41 = arith.constant 0 : index
    %50 = vector.load %arg5[%c3_40, %c0_41] : memref<4x1024xf32, #tpu.memory_space<vmem>>, vector<1x1024xf32>
    %51 = arith.mulf %49, %4 : vector<8x1024xf32>
    %cst_42 = arith.constant dense<0.000000e+00> : vector<1024xf32>
    %52 = vector.multi_reduction <add>, %51, %cst_42 [0] : vector<8x1024xf32> to vector<1024xf32>
    %53 = vector.shape_cast %52 : vector<1024xf32> to vector<1x1024xf32>
    %54 = arith.addf %50, %53 : vector<1x1024xf32>
    %c3_43 = arith.constant 3 : index
    %c0_44 = arith.constant 0 : index
    %55 = vector.load %arg5[%c3_43, %c0_44] : memref<4x1024xf32, #tpu.memory_space<vmem>>, vector<1x1024xf32>
    tpu.vector_store %arg5[%c3_43, %c0_44], %54 {strides = array<i32>} : memref<4x1024xf32, #tpu.memory_space<vmem>>, vector<1x1024xf32>,
    %c3_45 = arith.constant 3 : index
    %c0_46 = arith.constant 0 : index
    %56 = vector.load %arg6[%c3_45, %c0_46] : memref<4x1024xf32, #tpu.memory_space<vmem>>, vector<1x1024xf32>
    %cst_47 = arith.constant dense<0.000000e+00> : vector<1024xf32>
    %57 = vector.multi_reduction <add>, %49, %cst_47 [0] : vector<8x1024xf32> to vector<1024xf32>
    %58 = vector.shape_cast %57 : vector<1024xf32> to vector<1x1024xf32>
    %59 = arith.addf %56, %58 : vector<1x1024xf32>
    %c3_48 = arith.constant 3 : index
    %c0_49 = arith.constant 0 : index
    %60 = vector.load %arg6[%c3_48, %c0_49] : memref<4x1024xf32, #tpu.memory_space<vmem>>, vector<1x1024xf32>
    tpu.vector_store %arg6[%c3_48, %c0_49], %59 {strides = array<i32>} : memref<4x1024xf32, #tpu.memory_space<vmem>>, vector<1x1024xf32>,
    %c0_i32_50 = arith.constant 0 : i32
    %61 = arith.cmpi eq, %arg0, %c0_i32_50 : i32
    %62 = arith.extui %61 : i1 to i32
    %c0_i32_51 = arith.constant 0 : i32
    %63 = arith.cmpi ne, %62, %c0_i32_51 : i32
    scf.if %63 {
      %c0_52 = arith.constant 0 : index
      %c0_53 = arith.constant 0 : index
      %64 = vector.load %arg5[%c0_52, %c0_53] : memref<4x1024xf32, #tpu.memory_space<vmem>>, vector<4x1024xf32>
      %cst_54 = arith.constant dense<0.000000e+00> : vector<4xf32>
      %65 = vector.multi_reduction <add>, %64, %cst_54 [1] : vector<4x1024xf32> to vector<4xf32>
      %66 = vector.shape_cast %65 : vector<4xf32> to vector<4x1xf32>
      %c0_55 = arith.constant 0 : index
      %c0_56 = arith.constant 0 : index
      %67 = vector.load %arg6[%c0_55, %c0_56] : memref<4x1024xf32, #tpu.memory_space<vmem>>, vector<4x1024xf32>
      %cst_57 = arith.constant dense<0.000000e+00> : vector<4xf32>
      %68 = vector.multi_reduction <add>, %67, %cst_57 [1] : vector<4x1024xf32> to vector<4xf32>
      %69 = vector.shape_cast %68 : vector<4xf32> to vector<4x1xf32>
      %cst_58 = arith.constant 5.000000e-01 : f32
      %70 = vector.broadcast %cst_58 : f32 to vector<4x1xf32>
      %71 = arith.addf %66, %70 : vector<4x1xf32>
      %cst_59 = arith.constant 1.000000e+00 : f32
      %72 = vector.broadcast %cst_59 : f32 to vector<4x1xf32>
      %73 = arith.addf %69, %72 : vector<4x1xf32>
      %74 = arith.divf %71, %73 : vector<4x1xf32>
      %75 = math.log %74 : vector<4x1xf32>
      %cst_60 = arith.constant 1.000000e+00 : f32
      %76 = vector.broadcast %cst_60 : f32 to vector<4x1xf32>
      %77 = arith.subf %76, %74 : vector<4x1xf32>
      %78 = math.log %77 : vector<4x1xf32>
      %c0_61 = arith.constant 0 : index
      %c0_62 = arith.constant 0 : index
      %79 = vector.load %arg3[%c0_61, %c0_62] : memref<4x2xf32, #tpu.memory_space<vmem>>, vector<4x2xf32>
      %80 = vector.broadcast %75 : vector<4x1xf32> to vector<4x2xf32>
      %81 = arith.mulf %79, %80 : vector<4x2xf32>
      %cst_63 = arith.constant dense<0.000000e+00> : vector<2xf32>
      %82 = vector.multi_reduction <add>, %81, %cst_63 [0] : vector<4x2xf32> to vector<2xf32>
      %83 = vector.shape_cast %82 : vector<2xf32> to vector<1x2xf32>
      %84 = vector.broadcast %78 : vector<4x1xf32> to vector<4x2xf32>
      %85 = arith.mulf %79, %84 : vector<4x2xf32>
      %cst_64 = arith.constant dense<0.000000e+00> : vector<2xf32>
      %86 = vector.multi_reduction <add>, %85, %cst_64 [0] : vector<4x2xf32> to vector<2xf32>
      %87 = vector.shape_cast %86 : vector<2xf32> to vector<1x2xf32>
      %88 = math.absf %83 : vector<1x2xf32>
      %89 = math.absf %87 : vector<1x2xf32>
      %90 = arith.maximumf %88, %89 : vector<1x2xf32>
      %c0_65 = arith.constant 0 : index
      %c0_66 = arith.constant 0 : index
      %91 = vector.load %arg4[%c0_65, %c0_66] : memref<1x2xf32, #tpu.memory_space<vmem>>, vector<1x2xf32>
      tpu.vector_store %arg4[%c0_65, %c0_66], %90 {strides = array<i32>} : memref<1x2xf32, #tpu.memory_space<vmem>>, vector<1x2xf32>,
    } else {
    }
    return
  }
  func.func @transform_0(%arg0: i32) -> (i32, i32, i32) {
    %c0_i32 = arith.constant 0 : i32
    %c0_i32_0 = arith.constant 0 : i32
    %c0_i32_1 = arith.constant 0 : i32
    return %c0_i32, %arg0, %c0_i32_0 : i32, i32, i32
  }
  func.func @transform_1(%arg0: i32) -> (i32, i32) {
    %c0_i32 = arith.constant 0 : i32
    %c0_i32_0 = arith.constant 0 : i32
    return %arg0, %c0_i32 : i32, i32
  }
  func.func @transform_2(%arg0: i32) -> (i32, i32) {
    %c0_i32 = arith.constant 0 : i32
    %c0_i32_0 = arith.constant 0 : i32
    %c0_i32_1 = arith.constant 0 : i32
    return %c0_i32, %c0_i32_0 : i32, i32
  }
  func.func @transform_3(%arg0: i32) -> (i32, i32) {
    %c0_i32 = arith.constant 0 : i32
    %c0_i32_0 = arith.constant 0 : i32
    %c0_i32_1 = arith.constant 0 : i32
    return %c0_i32, %c0_i32_0 : i32, i32
  }
}

</mosaic_0001>

<llo_original>
// kernel: tpu_custom_call.1
$region0: #{tpu_custom_call.1}
  #allocation0 [shape = 'u32[]', space=smem, size = 0x4, offset = 0x4, fixed_abs, tag = 'smem constant byte address 0x4 - core index']
  #allocation1 [shape = 'u32[144,128]{1,0:T(1,128)}', space=vmem, size = 0x12000, scoped, tag = 'internal scratch']
  #allocation2 [shape = 'f32[4,1024]{1,0:T(4,128)}', space=vmem, size = 0x4000, scoped, tag = 'scratch operand']
  #allocation3 [shape = 'f32[4,1024]{1,0:T(4,128)}', space=vmem, size = 0x4000, scoped, tag = 'scratch operand']
  %s0 = inlined_call_operand.hbm [shape: s8[4,8,1024], index: 0, kind: input, shape index: {}]
  %s1 = inlined_call_operand.hbm [shape: s8[8,1024], index: 1, kind: input, shape index: {}]
  %s2 = inlined_call_operand.vmem [shape: f32[4,2], index: 2, kind: input, shape index: {}]
  %s3 = inlined_call_operand.hbm [shape: f32[1,2], index: 3, kind: output, shape index: {}]
  %s4 = sld [smem:[#allocation0]]
  $region38: #{tpu_custom_call.1} parent=0
    _
  %s6 = ssub.s32 1, %s4
  %s7 = scalar_select 0, %s6, %s4
  $region1: #{tpu_custom_call.1} parent=0
    #allocation4 [shape = 'u8[32768]{0}', space=vmem, size = 0x8000, scoped, tag = 'input window, operand 0, single buffered']
    #allocation5 [shape = 's32[1]{0}', space=sflag, size = 0x4, scoped, tag = 'scoped memory for tpu_custom_call.1']
    #allocation6 [shape = 's32[1]{0}', space=sflag, size = 0x4, scoped, tag = 'scoped memory for tpu_custom_call.1']
    #allocation7 [shape = 'u8[8192]{0}', space=vmem, size = 0x2000, scoped, tag = 'input window, operand 1, single buffered']
    #allocation8 [shape = 's32[1]{0}', space=sflag, size = 0x4, scoped, tag = 'scoped memory for tpu_custom_call.1']
    #allocation9 [shape = 'u8[512]{0}', space=vmem, size = 0x400, scoped, tag = 'output window, operand 0, single buffered']
    %8 = vsyncpa [#allocation5], 0
    %9 = vsyncpa [#allocation8], 0
    %10 = vsyncpa [#allocation6], 0
    // Predicated region
    $region2: #{tpu_custom_call.1} parent=1 // pred_check
      _
    $region3: #{tpu_custom_call.1} parent=1 // pred_check_branch
      %12 = sbr.rel (0) target = $region5
    $region4: #{tpu_custom_call.1} parent=1 // pred_region
      %s14 = ssub.s32 1024, 1024
      %15 = vsyncadd [#allocation5], %s14
      %s16 = sshll.u32 [#allocation4], 4
      %s17 = int_to_ptr.vmem [resolvable:$true] %s16
      %22 = dma.hbm_to_vmem [thread:$0]  %s0, 1024, %s17, [#allocation5], 256, 256, 16
    $region5: #{tpu_custom_call.1} parent=1 // pred_fallthru
      _
    // Predicated region
    $region6: #{tpu_custom_call.1} parent=1 // pred_check
      _
    $region7: #{tpu_custom_call.1} parent=1 // pred_check_branch
      %24 = sbr.rel (0) target = $region9
    $region8: #{tpu_custom_call.1} parent=1 // pred_region
      %s26 = ssub.s32 256, 256
      %27 = vsyncadd [#allocation8], %s26
      %s29 = sshll.u32 [#allocation7], 4
      %s30 = int_to_ptr.vmem [resolvable:$true] %s29
      %32 = dma.hbm_to_vmem [thread:$0]  %s1, 256, %s30, [#allocation8]
    $region9: #{tpu_custom_call.1} parent=1 // pred_fallthru
      _
    // Predicated region
    $region10: #{tpu_custom_call.1} parent=1 // pred_check
      _
    $region11: #{tpu_custom_call.1} parent=1 // pred_check_branch
      %34 = sbr.rel (0) target = $region13
    $region12: #{tpu_custom_call.1} parent=1 // pred_region
      _
    $region13: #{tpu_custom_call.1} parent=1 // pred_fallthru
      _
    // Predicated region
    $region14: #{tpu_custom_call.1} parent=1 // pred_check
      _
    $region15: #{tpu_custom_call.1} parent=1 // pred_check_branch
      %36 = sbr.rel (0) target = $region17
    $region16: #{tpu_custom_call.1} parent=1 // pred_region
      %37 = dma.done [#allocation5], 1024
    $region17: #{tpu_custom_call.1} parent=1 // pred_fallthru
      _
    // Predicated region
    $region18: #{tpu_custom_call.1} parent=1 // pred_check
      _
    $region19: #{tpu_custom_call.1} parent=1 // pred_check_branch
      %39 = sbr.rel (0) target = $region21
    $region20: #{tpu_custom_call.1} parent=1 // pred_region
      %40 = dma.done [#allocation8], 256
    $region21: #{tpu_custom_call.1} parent=1 // pred_fallthru
      _
    %p41 = scmp.eq.s32.totalorder 0, 0
    // Predicated region
    $region22: #{tpu_custom_call.1} parent=1 // pred_check
      %p42 = pneg %p41
    $region23: #{tpu_custom_call.1} parent=1 // pred_check_branch
      %44 = sbr.rel (%p42) target = $region25
    $region24: #{tpu_custom_call.1} parent=1 // pred_region
      %45 = vst [vmem:[#allocation2] sm:$0xff] 0.0
      %46 = vst [vmem:[#allocation2 + $0x8] sm:$0xff] 0.0
      %47 = vst [vmem:[#allocation2 + $0x10] sm:$0xff] 0.0
      %48 = vst [vmem:[#allocation2 + $0x18] sm:$0xff] 0.0
      %49 = vst [vmem:[#allocation3] sm:$0xff] 0.0
      %50 = vst [vmem:[#allocation3 + $0x8] sm:$0xff] 0.0
      %51 = vst [vmem:[#allocation3 + $0x10] sm:$0xff] 0.0
      %52 = vst [vmem:[#allocation3 + $0x18] sm:$0xff] 0.0
    $region25: #{tpu_custom_call.1} parent=1 // pred_fallthru
      _
    %v53 = vld [vmem:[#allocation7] sm:$0xff]
    %v54 = vld [vmem:[#allocation7 + $0x8] sm:$0xff]
    %v55 = vunpack.c.0.s8 %v53
    %v56 = vunpack.c.1.s8 %v53
    %v57 = vunpack.c.2.s8 %v53
    %v58 = vunpack.c.3.s8 %v53
    %v59 = vunpack.c.0.s8 %v54
    %v60 = vunpack.c.1.s8 %v54
    %v61 = vunpack.c.2.s8 %v54
    %v62 = vunpack.c.3.s8 %v54
    %v63 = vcvt.s32.f32 %v55
    %v64 = vcvt.s32.f32 %v56
    %v65 = vcvt.s32.f32 %v57
    %v66 = vcvt.s32.f32 %v58
    %v67 = vcvt.s32.f32 %v59
    %v68 = vcvt.s32.f32 %v60
    %v69 = vcvt.s32.f32 %v61
    %v70 = vcvt.s32.f32 %v62
    %v71 = vld [vmem:[#allocation4] sm:$0xff]
    %v72 = vld [vmem:[#allocation4 + $0x8] sm:$0xff]
    %v73 = vunpack.c.0.s8 %v71
    %v74 = vunpack.c.1.s8 %v71
    %v75 = vunpack.c.2.s8 %v71
    %v76 = vunpack.c.3.s8 %v71
    %v77 = vunpack.c.0.s8 %v72
    %v78 = vunpack.c.1.s8 %v72
    %v79 = vunpack.c.2.s8 %v72
    %v80 = vunpack.c.3.s8 %v72
    %v81 = vcvt.s32.f32 %v73
    %v82 = vcvt.s32.f32 %v74
    %v83 = vcvt.s32.f32 %v75
    %v84 = vcvt.s32.f32 %v76
    %v85 = vcvt.s32.f32 %v77
    %v86 = vcvt.s32.f32 %v78
    %v87 = vcvt.s32.f32 %v79
    %v88 = vcvt.s32.f32 %v80
    %v89 = vld [vmem:[#allocation2] ss:$4 sm:$0xff]
    %v90 = vmul.f32 %v81, %v63
    %v91 = vmul.f32 %v82, %v64
    %v92 = vmul.f32 %v83, %v65
    %v93 = vmul.f32 %v84, %v66
    %v94 = vmul.f32 %v85, %v67
    %v95 = vmul.f32 %v86, %v68
    %v96 = vmul.f32 %v87, %v69
    %v97 = vmul.f32 %v88, %v70
    %v98 = vrot.slane %v90, 4
    %v99 = vadd.f32 %v90, %v98
    %v100 = vrot.slane %v99, 2
    %v101 = vadd.f32 %v99, %v100
    %v102 = vrot.slane %v101, 1
    %v103 = vadd.f32 %v101, %v102
    %v104 = vrot.slane %v91, 4
    %v105 = vadd.f32 %v91, %v104
    %v106 = vrot.slane %v105, 2
    %v107 = vadd.f32 %v105, %v106
    %v108 = vrot.slane %v107, 1
    %v109 = vadd.f32 %v107, %v108
    %v110 = vrot.slane %v92, 4
    %v111 = vadd.f32 %v92, %v110
    %v112 = vrot.slane %v111, 2
    %v113 = vadd.f32 %v111, %v112
    %v114 = vrot.slane %v113, 1
    %v115 = vadd.f32 %v113, %v114
    %v116 = vrot.slane %v93, 4
    %v117 = vadd.f32 %v93, %v116
    %v118 = vrot.slane %v117, 2
    %v119 = vadd.f32 %v117, %v118
    %v120 = vrot.slane %v119, 1
    %v121 = vadd.f32 %v119, %v120
    %v122 = vrot.slane %v94, 4
    %v123 = vadd.f32 %v94, %v122
    %v124 = vrot.slane %v123, 2
    %v125 = vadd.f32 %v123, %v124
    %v126 = vrot.slane %v125, 1
    %v127 = vadd.f32 %v125, %v126
    %v128 = vrot.slane %v95, 4
    %v129 = vadd.f32 %v95, %v128
    %v130 = vrot.slane %v129, 2
    %v131 = vadd.f32 %v129, %v130
    %v132 = vrot.slane %v131, 1
    %v133 = vadd.f32 %v131, %v132
    %v134 = vrot.slane %v96, 4
    %v135 = vadd.f32 %v96, %v134
    %v136 = vrot.slane %v135, 2
    %v137 = vadd.f32 %v135, %v136
    %v138 = vrot.slane %v137, 1
    %v139 = vadd.f32 %v137, %v138
    %v140 = vrot.slane %v97, 4
    %v141 = vadd.f32 %v97, %v140
    %v142 = vrot.slane %v141, 2
    %v143 = vadd.f32 %v141, %v142
    %v144 = vrot.slane %v143, 1
    %v145 = vadd.f32 %v143, %v144
    %v154 = vcombine.low %v103, %v109
    %v155 = vcombine.low %v115, %v121
    %v156 = vcombine.low %v127, %v133
    %v157 = vcombine.low %v139, %v145
    %v159 = vunpack.c.l.s4 1966171168
    %v160 = vunpack.c.0.s8 %v159
    %v161 = vlaneseq
    %v162 = vshrl.u32 %v161, 7
    %v163 = vsub.s32 %v160, %v162
    %v164 = vrot.slane %v154, %v163
    %v166 = vunpack.c.l.s4 1966171168
    %v167 = vunpack.c.0.s8 %v166
    %v168 = vlaneseq
    %v169 = vshrl.u32 %v168, 7
    %v170 = vsub.s32 %v167, %v169
    %v171 = vrot.slane %v155, %v170
    %v173 = vunpack.c.l.s4 1966171168
    %v174 = vunpack.c.0.s8 %v173
    %v175 = vlaneseq
    %v176 = vshrl.u32 %v175, 7
    %v177 = vsub.s32 %v174, %v176
    %v178 = vrot.slane %v156, %v177
    %v180 = vunpack.c.l.s4 1966171168
    %v181 = vunpack.c.0.s8 %v180
    %v182 = vlaneseq
    %v183 = vshrl.u32 %v182, 7
    %v184 = vsub.s32 %v181, %v183
    %v185 = vrot.slane %v157, %v184
    %v186 = vcombine.low %v164, %v171
    %v187 = vcombine.low %v178, %v185
    %v189 = vunpack.c.l.s4 1966171168
    %v190 = vunpack.c.0.s8 %v189
    %v191 = vlaneseq
    %v192 = vshrl.u32 %v191, 7
    %v193 = vsub.s32 %v190, %v192
    %v194 = vrot.slane %v186, %v193
    %v196 = vunpack.c.l.s4 1966171168
    %v197 = vunpack.c.0.s8 %v196
    %v198 = vlaneseq
    %v199 = vshrl.u32 %v198, 7
    %v200 = vsub.s32 %v197, %v199
    %v201 = vrot.slane %v187, %v200
    %v202 = vcombine.low %v194, %v201
    %v204 = vadd.f32 %v89, %v202
    %205 = vst [vmem:[#allocation2] ss:$4 sm:$0xff] %v204
    %v206 = vld [vmem:[#allocation3] ss:$4 sm:$0xff]
    %v207 = vrot.slane %v81, 4
    %v208 = vadd.f32 %v81, %v207
    %v209 = vrot.slane %v208, 2
    %v210 = vadd.f32 %v208, %v209
    %v211 = vrot.slane %v210, 1
    %v212 = vadd.f32 %v210, %v211
    %v213 = vrot.slane %v82, 4
    %v214 = vadd.f32 %v82, %v213
    %v215 = vrot.slane %v214, 2
    %v216 = vadd.f32 %v214, %v215
    %v217 = vrot.slane %v216, 1
    %v218 = vadd.f32 %v216, %v217
    %v219 = vrot.slane %v83, 4
    %v220 = vadd.f32 %v83, %v219
    %v221 = vrot.slane %v220, 2
    %v222 = vadd.f32 %v220, %v221
    %v223 = vrot.slane %v222, 1
    %v224 = vadd.f32 %v222, %v223
    %v225 = vrot.slane %v84, 4
    %v226 = vadd.f32 %v84, %v225
    %v227 = vrot.slane %v226, 2
    %v228 = vadd.f32 %v226, %v227
    %v229 = vrot.slane %v228, 1
    %v230 = vadd.f32 %v228, %v229
    %v231 = vrot.slane %v85, 4
    %v232 = vadd.f32 %v85, %v231
    %v233 = vrot.slane %v232, 2
    %v234 = vadd.f32 %v232, %v233
    %v235 = vrot.slane %v234, 1
    %v236 = vadd.f32 %v234, %v235
    %v237 = vrot.slane %v86, 4
    %v238 = vadd.f32 %v86, %v237
    %v239 = vrot.slane %v238, 2
    %v240 = vadd.f32 %v238, %v239
    %v241 = vrot.slane %v240, 1
    %v242 = vadd.f32 %v240, %v241
    %v243 = vrot.slane %v87, 4
    %v244 = vadd.f32 %v87, %v243
    %v245 = vrot.slane %v244, 2
    %v246 = vadd.f32 %v244, %v245
    %v247 = vrot.slane %v246, 1
    %v248 = vadd.f32 %v246, %v247
    %v249 = vrot.slane %v88, 4
    %v250 = vadd.f32 %v88, %v249
    %v251 = vrot.slane %v250, 2
    %v252 = vadd.f32 %v250, %v251
    %v253 = vrot.slane %v252, 1
    %v254 = vadd.f32 %v252, %v253
    %v263 = vcombine.low %v212, %v218
    %v264 = vcombine.low %v224, %v230
    %v265 = vcombine.low %v236, %v242
    %v266 = vcombine.low %v248, %v254
    %v268 = vunpack.c.l.s4 1966171168
    %v269 = vunpack.c.0.s8 %v268
    %v270 = vlaneseq
    %v271 = vshrl.u32 %v270, 7
    %v272 = vsub.s32 %v269, %v271
    %v273 = vrot.slane %v263, %v272
    %v275 = vunpack.c.l.s4 1966171168
    %v276 = vunpack.c.0.s8 %v275
    %v277 = vlaneseq
    %v278 = vshrl.u32 %v277, 7
    %v279 = vsub.s32 %v276, %v278
    %v280 = vrot.slane %v264, %v279
    %v282 = vunpack.c.l.s4 1966171168
    %v283 = vunpack.c.0.s8 %v282
    %v284 = vlaneseq
    %v285 = vshrl.u32 %v284, 7
    %v286 = vsub.s32 %v283, %v285
    %v287 = vrot.slane %v265, %v286
    %v289 = vunpack.c.l.s4 1966171168
    %v290 = vunpack.c.0.s8 %v289
    %v291 = vlaneseq
    %v292 = vshrl.u32 %v291, 7
    %v293 = vsub.s32 %v290, %v292
    %v294 = vrot.slane %v266, %v293
    %v295 = vcombine.low %v273, %v280
    %v296 = vcombine.low %v287, %v294
    %v298 = vunpack.c.l.s4 1966171168
    %v299 = vunpack.c.0.s8 %v298
    %v300 = vlaneseq
    %v301 = vshrl.u32 %v300, 7
    %v302 = vsub.s32 %v299, %v301
    %v303 = vrot.slane %v295, %v302
    %v305 = vunpack.c.l.s4 1966171168
    %v306 = vunpack.c.0.s8 %v305
    %v307 = vlaneseq
    %v308 = vshrl.u32 %v307, 7
    %v309 = vsub.s32 %v306, %v308
    %v310 = vrot.slane %v296, %v309
    %v311 = vcombine.low %v303, %v310
    %v313 = vadd.f32 %v206, %v311
    %314 = vst [vmem:[#allocation3] ss:$4 sm:$0xff] %v313
    %s315 = scalar_lea.vmem [#allocation4], 16
    %v316 = vld [vmem:[%s315] sm:$0xff]
    %v317 = vld [vmem:[%s315 + $0x8] sm:$0xff]
    %v318 = vunpack.c.0.s8 %v316
    %v319 = vunpack.c.1.s8 %v316
    %v320 = vunpack.c.2.s8 %v316
    %v321 = vunpack.c.3.s8 %v316
    %v322 = vunpack.c.0.s8 %v317
    %v323 = vunpack.c.1.s8 %v317
    %v324 = vunpack.c.2.s8 %v317
    %v325 = vunpack.c.3.s8 %v317
    %v326 = vcvt.s32.f32 %v318
    %v327 = vcvt.s32.f32 %v319
    %v328 = vcvt.s32.f32 %v320
    %v329 = vcvt.s32.f32 %v321
    %v330 = vcvt.s32.f32 %v322
    %v331 = vcvt.s32.f32 %v323
    %v332 = vcvt.s32.f32 %v324
    %v333 = vcvt.s32.f32 %v325
    %s334 = scalar_lea.vmem [#allocation2], 1
    %v335 = vld [vmem:[%s334] ss:$4 sm:$0xff]
    %v336 = vmul.f32 %v326, %v63
    %v337 = vmul.f32 %v327, %v64
    %v338 = vmul.f32 %v328, %v65
    %v339 = vmul.f32 %v329, %v66
    %v340 = vmul.f32 %v330, %v67
    %v341 = vmul.f32 %v331, %v68
    %v342 = vmul.f32 %v332, %v69
    %v343 = vmul.f32 %v333, %v70
    %v344 = vrot.slane %v336, 4
    %v345 = vadd.f32 %v336, %v344
    %v346 = vrot.slane %v345, 2
    %v347 = vadd.f32 %v345, %v346
    %v348 = vrot.slane %v347, 1
    %v349 = vadd.f32 %v347, %v348
    %v350 = vrot.slane %v337, 4
    %v351 = vadd.f32 %v337, %v350
    %v352 = vrot.slane %v351, 2
    %v353 = vadd.f32 %v351, %v352
    %v354 = vrot.slane %v353, 1
    %v355 = vadd.f32 %v353, %v354
    %v356 = vrot.slane %v338, 4
    %v357 = vadd.f32 %v338, %v356
    %v358 = vrot.slane %v357, 2
    %v359 = vadd.f32 %v357, %v358
    %v360 = vrot.slane %v359, 1
    %v361 = vadd.f32 %v359, %v360
    %v362 = vrot.slane %v339, 4
    %v363 = vadd.f32 %v339, %v362
    %v364 = vrot.slane %v363, 2
    %v365 = vadd.f32 %v363, %v364
    %v366 = vrot.slane %v365, 1
    %v367 = vadd.f32 %v365, %v366
    %v368 = vrot.slane %v340, 4
    %v369 = vadd.f32 %v340, %v368
    %v370 = vrot.slane %v369, 2
    %v371 = vadd.f32 %v369, %v370
    %v372 = vrot.slane %v371, 1
    %v373 = vadd.f32 %v371, %v372
    %v374 = vrot.slane %v341, 4
    %v375 = vadd.f32 %v341, %v374
    %v376 = vrot.slane %v375, 2
    %v377 = vadd.f32 %v375, %v376
    %v378 = vrot.slane %v377, 1
    %v379 = vadd.f32 %v377, %v378
    %v380 = vrot.slane %v342, 4
    %v381 = vadd.f32 %v342, %v380
    %v382 = vrot.slane %v381, 2
    %v383 = vadd.f32 %v381, %v382
    %v384 = vrot.slane %v383, 1
    %v385 = vadd.f32 %v383, %v384
    %v386 = vrot.slane %v343, 4
    %v387 = vadd.f32 %v343, %v386
    %v388 = vrot.slane %v387, 2
    %v389 = vadd.f32 %v387, %v388
    %v390 = vrot.slane %v389, 1
    %v391 = vadd.f32 %v389, %v390
    %v400 = vcombine.low %v349, %v355
    %v401 = vcombine.low %v361, %v367
    %v402 = vcombine.low %v373, %v379
    %v403 = vcombine.low %v385, %v391
    %v405 = vunpack.c.l.s4 1966171168
    %v406 = vunpack.c.0.s8 %v405
    %v407 = vlaneseq
    %v408 = vshrl.u32 %v407, 7
    %v409 = vsub.s32 %v406, %v408
    %v410 = vrot.slane %v400, %v409
    %v412 = vunpack.c.l.s4 1966171168
    %v413 = vunpack.c.0.s8 %v412
    %v414 = vlaneseq
    %v415 = vshrl.u32 %v414, 7
    %v416 = vsub.s32 %v413, %v415
    %v417 = vrot.slane %v401, %v416
    %v419 = vunpack.c.l.s4 1966171168
    %v420 = vunpack.c.0.s8 %v419
    %v421 = vlaneseq
    %v422 = vshrl.u32 %v421, 7
    %v423 = vsub.s32 %v420, %v422
    %v424 = vrot.slane %v402, %v423
    %v426 = vunpack.c.l.s4 1966171168
    %v427 = vunpack.c.0.s8 %v426
    %v428 = vlaneseq
    %v429 = vshrl.u32 %v428, 7
    %v430 = vsub.s32 %v427, %v429
    %v431 = vrot.slane %v403, %v430
    %v432 = vcombine.low %v410, %v417
    %v433 = vcombine.low %v424, %v431
    %v435 = vunpack.c.l.s4 1966171168
    %v436 = vunpack.c.0.s8 %v435
    %v437 = vlaneseq
    %v438 = vshrl.u32 %v437, 7
    %v439 = vsub.s32 %v436, %v438
    %v440 = vrot.slane %v432, %v439
    %v442 = vunpack.c.l.s4 1966171168
    %v443 = vunpack.c.0.s8 %v442
    %v444 = vlaneseq
    %v445 = vshrl.u32 %v444, 7
    %v446 = vsub.s32 %v443, %v445
    %v447 = vrot.slane %v433, %v446
    %v448 = vcombine.low %v440, %v447
    %v450 = vadd.f32 %v335, %v448
    %451 = vst [vmem:[%s334] ss:$4 sm:$0xff] %v450
    %s452 = scalar_lea.vmem [#allocation3], 1
    %v453 = vld [vmem:[%s452] ss:$4 sm:$0xff]
    %v454 = vrot.slane %v326, 4
    %v455 = vadd.f32 %v326, %v454
    %v456 = vrot.slane %v455, 2
    %v457 = vadd.f32 %v455, %v456
    %v458 = vrot.slane %v457, 1
    %v459 = vadd.f32 %v457, %v458
    %v460 = vrot.slane %v327, 4
    %v461 = vadd.f32 %v327, %v460
    %v462 = vrot.slane %v461, 2
    %v463 = vadd.f32 %v461, %v462
    %v464 = vrot.slane %v463, 1
    %v465 = vadd.f32 %v463, %v464
    %v466 = vrot.slane %v328, 4
    %v467 = vadd.f32 %v328, %v466
    %v468 = vrot.slane %v467, 2
    %v469 = vadd.f32 %v467, %v468
    %v470 = vrot.slane %v469, 1
    %v471 = vadd.f32 %v469, %v470
    %v472 = vrot.slane %v329, 4
    %v473 = vadd.f32 %v329, %v472
    %v474 = vrot.slane %v473, 2
    %v475 = vadd.f32 %v473, %v474
    %v476 = vrot.slane %v475, 1
    %v477 = vadd.f32 %v475, %v476
    %v478 = vrot.slane %v330, 4
    %v479 = vadd.f32 %v330, %v478
    %v480 = vrot.slane %v479, 2
    %v481 = vadd.f32 %v479, %v480
    %v482 = vrot.slane %v481, 1
    %v483 = vadd.f32 %v481, %v482
    %v484 = vrot.slane %v331, 4
    %v485 = vadd.f32 %v331, %v484
    %v486 = vrot.slane %v485, 2
    %v487 = vadd.f32 %v485, %v486
    %v488 = vrot.slane %v487, 1
    %v489 = vadd.f32 %v487, %v488
    %v490 = vrot.slane %v332, 4
    %v491 = vadd.f32 %v332, %v490
    %v492 = vrot.slane %v491, 2
    %v493 = vadd.f32 %v491, %v492
    %v494 = vrot.slane %v493, 1
    %v495 = vadd.f32 %v493, %v494
    %v496 = vrot.slane %v333, 4
    %v497 = vadd.f32 %v333, %v496
    %v498 = vrot.slane %v497, 2
    %v499 = vadd.f32 %v497, %v498
    %v500 = vrot.slane %v499, 1
    %v501 = vadd.f32 %v499, %v500
    %v510 = vcombine.low %v459, %v465
    %v511 = vcombine.low %v471, %v477
    %v512 = vcombine.low %v483, %v489
    %v513 = vcombine.low %v495, %v501
    %v515 = vunpack.c.l.s4 1966171168
    %v516 = vunpack.c.0.s8 %v515
    %v517 = vlaneseq
    %v518 = vshrl.u32 %v517, 7
    %v519 = vsub.s32 %v516, %v518
    %v520 = vrot.slane %v510, %v519
    %v522 = vunpack.c.l.s4 1966171168
    %v523 = vunpack.c.0.s8 %v522
    %v524 = vlaneseq
    %v525 = vshrl.u32 %v524, 7
    %v526 = vsub.s32 %v523, %v525
    %v527 = vrot.slane %v511, %v526
    %v529 = vunpack.c.l.s4 1966171168
    %v530 = vunpack.c.0.s8 %v529
    %v531 = vlaneseq
    %v532 = vshrl.u32 %v531, 7
    %v533 = vsub.s32 %v530, %v532
    %v534 = vrot.slane %v512, %v533
    %v536 = vunpack.c.l.s4 1966171168
    %v537 = vunpack.c.0.s8 %v536
    %v538 = vlaneseq
    %v539 = vshrl.u32 %v538, 7
    %v540 = vsub.s32 %v537, %v539
    %v541 = vrot.slane %v513, %v540
    %v542 = vcombine.low %v520, %v527
    %v543 = vcombine.low %v534, %v541
    %v545 = vunpack.c.l.s4 1966171168
    %v546 = vunpack.c.0.s8 %v545
    %v547 = vlaneseq
    %v548 = vshrl.u32 %v547, 7
    %v549 = vsub.s32 %v546, %v548
    %v550 = vrot.slane %v542, %v549
    %v552 = vunpack.c.l.s4 1966171168
    %v553 = vunpack.c.0.s8 %v552
    %v554 = vlaneseq
    %v555 = vshrl.u32 %v554, 7
    %v556 = vsub.s32 %v553, %v555
    %v557 = vrot.slane %v543, %v556
    %v558 = vcombine.low %v550, %v557
    %v560 = vadd.f32 %v453, %v558
    %561 = vst [vmem:[%s452] ss:$4 sm:$0xff] %v560
    %s562 = scalar_lea.vmem [#allocation4], 32
    %v563 = vld [vmem:[%s562] sm:$0xff]
    %v564 = vld [vmem:[%s562 + $0x8] sm:$0xff]
    %v565 = vunpack.c.0.s8 %v563
    %v566 = vunpack.c.1.s8 %v563
    %v567 = vunpack.c.2.s8 %v563
    %v568 = vunpack.c.3.s8 %v563
    %v569 = vunpack.c.0.s8 %v564
    %v570 = vunpack.c.1.s8 %v564
    %v571 = vunpack.c.2.s8 %v564
    %v572 = vunpack.c.3.s8 %v564
    %v573 = vcvt.s32.f32 %v565
    %v574 = vcvt.s32.f32 %v566
    %v575 = vcvt.s32.f32 %v567
    %v576 = vcvt.s32.f32 %v568
    %v577 = vcvt.s32.f32 %v569
    %v578 = vcvt.s32.f32 %v570
    %v579 = vcvt.s32.f32 %v571
    %v580 = vcvt.s32.f32 %v572
    %s581 = scalar_lea.vmem [#allocation2], 2
    %v582 = vld [vmem:[%s581] ss:$4 sm:$0xff]
    %v583 = vmul.f32 %v573, %v63
    %v584 = vmul.f32 %v574, %v64
    %v585 = vmul.f32 %v575, %v65
    %v586 = vmul.f32 %v576, %v66
    %v587 = vmul.f32 %v577, %v67
    %v588 = vmul.f32 %v578, %v68
    %v589 = vmul.f32 %v579, %v69
    %v590 = vmul.f32 %v580, %v70
    %v591 = vrot.slane %v583, 4
    %v592 = vadd.f32 %v583, %v591
    %v593 = vrot.slane %v592, 2
    %v594 = vadd.f32 %v592, %v593
    %v595 = vrot.slane %v594, 1
    %v596 = vadd.f32 %v594, %v595
    %v597 = vrot.slane %v584, 4
    %v598 = vadd.f32 %v584, %v597
    %v599 = vrot.slane %v598, 2
    %v600 = vadd.f32 %v598, %v599
    %v601 = vrot.slane %v600, 1
    %v602 = vadd.f32 %v600, %v601
    %v603 = vrot.slane %v585, 4
    %v604 = vadd.f32 %v585, %v603
    %v605 = vrot.slane %v604, 2
    %v606 = vadd.f32 %v604, %v605
    %v607 = vrot.slane %v606, 1
    %v608 = vadd.f32 %v606, %v607
    %v609 = vrot.slane %v586, 4
    %v610 = vadd.f32 %v586, %v609
    %v611 = vrot.slane %v610, 2
    %v612 = vadd.f32 %v610, %v611
    %v613 = vrot.slane %v612, 1
    %v614 = vadd.f32 %v612, %v613
    %v615 = vrot.slane %v587, 4
    %v616 = vadd.f32 %v587, %v615
    %v617 = vrot.slane %v616, 2
    %v618 = vadd.f32 %v616, %v617
    %v619 = vrot.slane %v618, 1
    %v620 = vadd.f32 %v618, %v619
    %v621 = vrot.slane %v588, 4
    %v622 = vadd.f32 %v588, %v621
    %v623 = vrot.slane %v622, 2
    %v624 = vadd.f32 %v622, %v623
    %v625 = vrot.slane %v624, 1
    %v626 = vadd.f32 %v624, %v625
    %v627 = vrot.slane %v589, 4
    %v628 = vadd.f32 %v589, %v627
    %v629 = vrot.slane %v628, 2
    %v630 = vadd.f32 %v628, %v629
    %v631 = vrot.slane %v630, 1
    %v632 = vadd.f32 %v630, %v631
    %v633 = vrot.slane %v590, 4
    %v634 = vadd.f32 %v590, %v633
    %v635 = vrot.slane %v634, 2
    %v636 = vadd.f32 %v634, %v635
    %v637 = vrot.slane %v636, 1
    %v638 = vadd.f32 %v636, %v637
    %v647 = vcombine.low %v596, %v602
    %v648 = vcombine.low %v608, %v614
    %v649 = vcombine.low %v620, %v626
    %v650 = vcombine.low %v632, %v638
    %v652 = vunpack.c.l.s4 1966171168
    %v653 = vunpack.c.0.s8 %v652
    %v654 = vlaneseq
    %v655 = vshrl.u32 %v654, 7
    %v656 = vsub.s32 %v653, %v655
    %v657 = vrot.slane %v647, %v656
    %v659 = vunpack.c.l.s4 1966171168
    %v660 = vunpack.c.0.s8 %v659
    %v661 = vlaneseq
    %v662 = vshrl.u32 %v661, 7
    %v663 = vsub.s32 %v660, %v662
    %v664 = vrot.slane %v648, %v663
    %v666 = vunpack.c.l.s4 1966171168
    %v667 = vunpack.c.0.s8 %v666
    %v668 = vlaneseq
    %v669 = vshrl.u32 %v668, 7
    %v670 = vsub.s32 %v667, %v669
    %v671 = vrot.slane %v649, %v670
    %v673 = vunpack.c.l.s4 1966171168
    %v674 = vunpack.c.0.s8 %v673
    %v675 = vlaneseq
    %v676 = vshrl.u32 %v675, 7
    %v677 = vsub.s32 %v674, %v676
    %v678 = vrot.slane %v650, %v677
    %v679 = vcombine.low %v657, %v664
    %v680 = vcombine.low %v671, %v678
    %v682 = vunpack.c.l.s4 1966171168
    %v683 = vunpack.c.0.s8 %v682
    %v684 = vlaneseq
    %v685 = vshrl.u32 %v684, 7
    %v686 = vsub.s32 %v683, %v685
    %v687 = vrot.slane %v679, %v686
    %v689 = vunpack.c.l.s4 1966171168
    %v690 = vunpack.c.0.s8 %v689
    %v691 = vlaneseq
    %v692 = vshrl.u32 %v691, 7
    %v693 = vsub.s32 %v690, %v692
    %v694 = vrot.slane %v680, %v693
    %v695 = vcombine.low %v687, %v694
    %v697 = vadd.f32 %v582, %v695
    %698 = vst [vmem:[%s581] ss:$4 sm:$0xff] %v697
    %s699 = scalar_lea.vmem [#allocation3], 2
    %v700 = vld [vmem:[%s699] ss:$4 sm:$0xff]
    %v701 = vrot.slane %v573, 4
    %v702 = vadd.f32 %v573, %v701
    %v703 = vrot.slane %v702, 2
    %v704 = vadd.f32 %v702, %v703
    %v705 = vrot.slane %v704, 1
    %v706 = vadd.f32 %v704, %v705
    %v707 = vrot.slane %v574, 4
    %v708 = vadd.f32 %v574, %v707
    %v709 = vrot.slane %v708, 2
    %v710 = vadd.f32 %v708, %v709
    %v711 = vrot.slane %v710, 1
    %v712 = vadd.f32 %v710, %v711
    %v713 = vrot.slane %v575, 4
    %v714 = vadd.f32 %v575, %v713
    %v715 = vrot.slane %v714, 2
    %v716 = vadd.f32 %v714, %v715
    %v717 = vrot.slane %v716, 1
    %v718 = vadd.f32 %v716, %v717
    %v719 = vrot.slane %v576, 4
    %v720 = vadd.f32 %v576, %v719
    %v721 = vrot.slane %v720, 2
    %v722 = vadd.f32 %v720, %v721
    %v723 = vrot.slane %v722, 1
    %v724 = vadd.f32 %v722, %v723
    %v725 = vrot.slane %v577, 4
    %v726 = vadd.f32 %v577, %v725
    %v727 = vrot.slane %v726, 2
    %v728 = vadd.f32 %v726, %v727
    %v729 = vrot.slane %v728, 1
    %v730 = vadd.f32 %v728, %v729
    %v731 = vrot.slane %v578, 4
    %v732 = vadd.f32 %v578, %v731
    %v733 = vrot.slane %v732, 2
    %v734 = vadd.f32 %v732, %v733
    %v735 = vrot.slane %v734, 1
    %v736 = vadd.f32 %v734, %v735
    %v737 = vrot.slane %v579, 4
    %v738 = vadd.f32 %v579, %v737
    %v739 = vrot.slane %v738, 2
    %v740 = vadd.f32 %v738, %v739
    %v741 = vrot.slane %v740, 1
    %v742 = vadd.f32 %v740, %v741
    %v743 = vrot.slane %v580, 4
    %v744 = vadd.f32 %v580, %v743
    %v745 = vrot.slane %v744, 2
    %v746 = vadd.f32 %v744, %v745
    %v747 = vrot.slane %v746, 1
    %v748 = vadd.f32 %v746, %v747
    %v757 = vcombine.low %v706, %v712
    %v758 = vcombine.low %v718, %v724
    %v759 = vcombine.low %v730, %v736
    %v760 = vcombine.low %v742, %v748
    %v762 = vunpack.c.l.s4 1966171168
    %v763 = vunpack.c.0.s8 %v762
    %v764 = vlaneseq
    %v765 = vshrl.u32 %v764, 7
    %v766 = vsub.s32 %v763, %v765
    %v767 = vrot.slane %v757, %v766
    %v769 = vunpack.c.l.s4 1966171168
    %v770 = vunpack.c.0.s8 %v769
    %v771 = vlaneseq
    %v772 = vshrl.u32 %v771, 7
    %v773 = vsub.s32 %v770, %v772
    %v774 = vrot.slane %v758, %v773
    %v776 = vunpack.c.l.s4 1966171168
    %v777 = vunpack.c.0.s8 %v776
    %v778 = vlaneseq
    %v779 = vshrl.u32 %v778, 7
    %v780 = vsub.s32 %v777, %v779
    %v781 = vrot.slane %v759, %v780
    %v783 = vunpack.c.l.s4 1966171168
    %v784 = vunpack.c.0.s8 %v783
    %v785 = vlaneseq
    %v786 = vshrl.u32 %v785, 7
    %v787 = vsub.s32 %v784, %v786
    %v788 = vrot.slane %v760, %v787
    %v789 = vcombine.low %v767, %v774
    %v790 = vcombine.low %v781, %v788
    %v792 = vunpack.c.l.s4 1966171168
    %v793 = vunpack.c.0.s8 %v792
    %v794 = vlaneseq
    %v795 = vshrl.u32 %v794, 7
    %v796 = vsub.s32 %v793, %v795
    %v797 = vrot.slane %v789, %v796
    %v799 = vunpack.c.l.s4 1966171168
    %v800 = vunpack.c.0.s8 %v799
    %v801 = vlaneseq
    %v802 = vshrl.u32 %v801, 7
    %v803 = vsub.s32 %v800, %v802
    %v804 = vrot.slane %v790, %v803
    %v805 = vcombine.low %v797, %v804
    %v807 = vadd.f32 %v700, %v805
    %808 = vst [vmem:[%s699] ss:$4 sm:$0xff] %v807
    %s809 = scalar_lea.vmem [#allocation4], 48
    %v810 = vld [vmem:[%s809] sm:$0xff]
    %v811 = vld [vmem:[%s809 + $0x8] sm:$0xff]
    %v812 = vunpack.c.0.s8 %v810
    %v813 = vunpack.c.1.s8 %v810
    %v814 = vunpack.c.2.s8 %v810
    %v815 = vunpack.c.3.s8 %v810
    %v816 = vunpack.c.0.s8 %v811
    %v817 = vunpack.c.1.s8 %v811
    %v818 = vunpack.c.2.s8 %v811
    %v819 = vunpack.c.3.s8 %v811
    %v820 = vcvt.s32.f32 %v812
    %v821 = vcvt.s32.f32 %v813
    %v822 = vcvt.s32.f32 %v814
    %v823 = vcvt.s32.f32 %v815
    %v824 = vcvt.s32.f32 %v816
    %v825 = vcvt.s32.f32 %v817
    %v826 = vcvt.s32.f32 %v818
    %v827 = vcvt.s32.f32 %v819
    %s828 = scalar_lea.vmem [#allocation2], 3
    %v829 = vld [vmem:[%s828] ss:$4 sm:$0xff]
    %v830 = vmul.f32 %v820, %v63
    %v831 = vmul.f32 %v821, %v64
    %v832 = vmul.f32 %v822, %v65
    %v833 = vmul.f32 %v823, %v66
    %v834 = vmul.f32 %v824, %v67
    %v835 = vmul.f32 %v825, %v68
    %v836 = vmul.f32 %v826, %v69
    %v837 = vmul.f32 %v827, %v70
    %v838 = vrot.slane %v830, 4
    %v839 = vadd.f32 %v830, %v838
    %v840 = vrot.slane %v839, 2
    %v841 = vadd.f32 %v839, %v840
    %v842 = vrot.slane %v841, 1
    %v843 = vadd.f32 %v841, %v842
    %v844 = vrot.slane %v831, 4
    %v845 = vadd.f32 %v831, %v844
    %v846 = vrot.slane %v845, 2
    %v847 = vadd.f32 %v845, %v846
    %v848 = vrot.slane %v847, 1
    %v849 = vadd.f32 %v847, %v848
    %v850 = vrot.slane %v832, 4
    %v851 = vadd.f32 %v832, %v850
    %v852 = vrot.slane %v851, 2
    %v853 = vadd.f32 %v851, %v852
    %v854 = vrot.slane %v853, 1
    %v855 = vadd.f32 %v853, %v854
    %v856 = vrot.slane %v833, 4
    %v857 = vadd.f32 %v833, %v856
    %v858 = vrot.slane %v857, 2
    %v859 = vadd.f32 %v857, %v858
    %v860 = vrot.slane %v859, 1
    %v861 = vadd.f32 %v859, %v860
    %v862 = vrot.slane %v834, 4
    %v863 = vadd.f32 %v834, %v862
    %v864 = vrot.slane %v863, 2
    %v865 = vadd.f32 %v863, %v864
    %v866 = vrot.slane %v865, 1
    %v867 = vadd.f32 %v865, %v866
    %v868 = vrot.slane %v835, 4
    %v869 = vadd.f32 %v835, %v868
    %v870 = vrot.slane %v869, 2
    %v871 = vadd.f32 %v869, %v870
    %v872 = vrot.slane %v871, 1
    %v873 = vadd.f32 %v871, %v872
    %v874 = vrot.slane %v836, 4
    %v875 = vadd.f32 %v836, %v874
    %v876 = vrot.slane %v875, 2
    %v877 = vadd.f32 %v875, %v876
    %v878 = vrot.slane %v877, 1
    %v879 = vadd.f32 %v877, %v878
    %v880 = vrot.slane %v837, 4
    %v881 = vadd.f32 %v837, %v880
    %v882 = vrot.slane %v881, 2
    %v883 = vadd.f32 %v881, %v882
    %v884 = vrot.slane %v883, 1
    %v885 = vadd.f32 %v883, %v884
    %v894 = vcombine.low %v843, %v849
    %v895 = vcombine.low %v855, %v861
    %v896 = vcombine.low %v867, %v873
    %v897 = vcombine.low %v879, %v885
    %v899 = vunpack.c.l.s4 1966171168
    %v900 = vunpack.c.0.s8 %v899
    %v901 = vlaneseq
    %v902 = vshrl.u32 %v901, 7
    %v903 = vsub.s32 %v900, %v902
    %v904 = vrot.slane %v894, %v903
    %v906 = vunpack.c.l.s4 1966171168
    %v907 = vunpack.c.0.s8 %v906
    %v908 = vlaneseq
    %v909 = vshrl.u32 %v908, 7
    %v910 = vsub.s32 %v907, %v909
    %v911 = vrot.slane %v895, %v910
    %v913 = vunpack.c.l.s4 1966171168
    %v914 = vunpack.c.0.s8 %v913
    %v915 = vlaneseq
    %v916 = vshrl.u32 %v915, 7
    %v917 = vsub.s32 %v914, %v916
    %v918 = vrot.slane %v896, %v917
    %v920 = vunpack.c.l.s4 1966171168
    %v921 = vunpack.c.0.s8 %v920
    %v922 = vlaneseq
    %v923 = vshrl.u32 %v922, 7
    %v924 = vsub.s32 %v921, %v923
    %v925 = vrot.slane %v897, %v924
    %v926 = vcombine.low %v904, %v911
    %v927 = vcombine.low %v918, %v925
    %v929 = vunpack.c.l.s4 1966171168
    %v930 = vunpack.c.0.s8 %v929
    %v931 = vlaneseq
    %v932 = vshrl.u32 %v931, 7
    %v933 = vsub.s32 %v930, %v932
    %v934 = vrot.slane %v926, %v933
    %v936 = vunpack.c.l.s4 1966171168
    %v937 = vunpack.c.0.s8 %v936
    %v938 = vlaneseq
    %v939 = vshrl.u32 %v938, 7
    %v940 = vsub.s32 %v937, %v939
    %v941 = vrot.slane %v927, %v940
    %v942 = vcombine.low %v934, %v941
    %v944 = vadd.f32 %v829, %v942
    %945 = vst [vmem:[%s828] ss:$4 sm:$0xff] %v944
    %s946 = scalar_lea.vmem [#allocation3], 3
    %v947 = vld [vmem:[%s946] ss:$4 sm:$0xff]
    %v948 = vrot.slane %v820, 4
    %v949 = vadd.f32 %v820, %v948
    %v950 = vrot.slane %v949, 2
    %v951 = vadd.f32 %v949, %v950
    %v952 = vrot.slane %v951, 1
    %v953 = vadd.f32 %v951, %v952
    %v954 = vrot.slane %v821, 4
    %v955 = vadd.f32 %v821, %v954
    %v956 = vrot.slane %v955, 2
    %v957 = vadd.f32 %v955, %v956
    %v958 = vrot.slane %v957, 1
    %v959 = vadd.f32 %v957, %v958
    %v960 = vrot.slane %v822, 4
    %v961 = vadd.f32 %v822, %v960
    %v962 = vrot.slane %v961, 2
    %v963 = vadd.f32 %v961, %v962
    %v964 = vrot.slane %v963, 1
    %v965 = vadd.f32 %v963, %v964
    %v966 = vrot.slane %v823, 4
    %v967 = vadd.f32 %v823, %v966
    %v968 = vrot.slane %v967, 2
    %v969 = vadd.f32 %v967, %v968
    %v970 = vrot.slane %v969, 1
    %v971 = vadd.f32 %v969, %v970
    %v972 = vrot.slane %v824, 4
    %v973 = vadd.f32 %v824, %v972
    %v974 = vrot.slane %v973, 2
    %v975 = vadd.f32 %v973, %v974
    %v976 = vrot.slane %v975, 1
    %v977 = vadd.f32 %v975, %v976
    %v978 = vrot.slane %v825, 4
    %v979 = vadd.f32 %v825, %v978
    %v980 = vrot.slane %v979, 2
    %v981 = vadd.f32 %v979, %v980
    %v982 = vrot.slane %v981, 1
    %v983 = vadd.f32 %v981, %v982
    %v984 = vrot.slane %v826, 4
    %v985 = vadd.f32 %v826, %v984
    %v986 = vrot.slane %v985, 2
    %v987 = vadd.f32 %v985, %v986
    %v988 = vrot.slane %v987, 1
    %v989 = vadd.f32 %v987, %v988
    %v990 = vrot.slane %v827, 4
    %v991 = vadd.f32 %v827, %v990
    %v992 = vrot.slane %v991, 2
    %v993 = vadd.f32 %v991, %v992
    %v994 = vrot.slane %v993, 1
    %v995 = vadd.f32 %v993, %v994
    %v1004 = vcombine.low %v953, %v959
    %v1005 = vcombine.low %v965, %v971
    %v1006 = vcombine.low %v977, %v983
    %v1007 = vcombine.low %v989, %v995
    %v1009 = vunpack.c.l.s4 1966171168
    %v1010 = vunpack.c.0.s8 %v1009
    %v1011 = vlaneseq
    %v1012 = vshrl.u32 %v1011, 7
    %v1013 = vsub.s32 %v1010, %v1012
    %v1014 = vrot.slane %v1004, %v1013
    %v1016 = vunpack.c.l.s4 1966171168
    %v1017 = vunpack.c.0.s8 %v1016
    %v1018 = vlaneseq
    %v1019 = vshrl.u32 %v1018, 7
    %v1020 = vsub.s32 %v1017, %v1019
    %v1021 = vrot.slane %v1005, %v1020
    %v1023 = vunpack.c.l.s4 1966171168
    %v1024 = vunpack.c.0.s8 %v1023
    %v1025 = vlaneseq
    %v1026 = vshrl.u32 %v1025, 7
    %v1027 = vsub.s32 %v1024, %v1026
    %v1028 = vrot.slane %v1006, %v1027
    %v1030 = vunpack.c.l.s4 1966171168
    %v1031 = vunpack.c.0.s8 %v1030
    %v1032 = vlaneseq
    %v1033 = vshrl.u32 %v1032, 7
    %v1034 = vsub.s32 %v1031, %v1033
    %v1035 = vrot.slane %v1007, %v1034
    %v1036 = vcombine.low %v1014, %v1021
    %v1037 = vcombine.low %v1028, %v1035
    %v1039 = vunpack.c.l.s4 1966171168
    %v1040 = vunpack.c.0.s8 %v1039
    %v1041 = vlaneseq
    %v1042 = vshrl.u32 %v1041, 7
    %v1043 = vsub.s32 %v1040, %v1042
    %v1044 = vrot.slane %v1036, %v1043
    %v1046 = vunpack.c.l.s4 1966171168
    %v1047 = vunpack.c.0.s8 %v1046
    %v1048 = vlaneseq
    %v1049 = vshrl.u32 %v1048, 7
    %v1050 = vsub.s32 %v1047, %v1049
    %v1051 = vrot.slane %v1037, %v1050
    %v1052 = vcombine.low %v1044, %v1051
    %v1054 = vadd.f32 %v947, %v1052
    %1055 = vst [vmem:[%s946] ss:$4 sm:$0xff] %v1054
    // Predicated region
    $region26: #{tpu_custom_call.1} parent=1 // pred_check
      %p1056 = pneg %p41
    $region27: #{tpu_custom_call.1} parent=1 // pred_check_branch
      %1058 = sbr.rel (%p1056) target = $region29
    $region28: #{tpu_custom_call.1} parent=1 // pred_region
      %v1059 = vld [vmem:[#allocation2] sm:$0xff]
      %v1060 = vld [vmem:[#allocation2 + $0x8] sm:$0xff]
      %v1061 = vld [vmem:[#allocation2 + $0x10] sm:$0xff]
      %v1062 = vld [vmem:[#allocation2 + $0x18] sm:$0xff]
      %v1067 = vcombine.high %v1059, %v1059
      %v1068 = vcombine.high %v1060, %v1060
      %v1069 = vcombine.high %v1061, %v1061
      %v1070 = vcombine.high %v1062, %v1062
      %vm1075 = vcmask 1043456
      %v1076 = vsel %vm1075, %v1059, 0.0
      %v1077 = vsel %vm1075, %v1067, 0.0
      %v1078 = vadd.f32 %v1076, %v1077
      %v1079 = vsel %vm1075, %v1060, 0.0
      %v1080 = vadd.f32 %v1078, %v1079
      %v1081 = vsel %vm1075, %v1068, 0.0
      %v1082 = vadd.f32 %v1080, %v1081
      %v1083 = vsel %vm1075, %v1061, 0.0
      %v1084 = vadd.f32 %v1082, %v1083
      %v1085 = vsel %vm1075, %v1069, 0.0
      %v1086 = vadd.f32 %v1084, %v1085
      %v1087 = vsel %vm1075, %v1062, 0.0
      %v1088 = vadd.f32 %v1086, %v1087
      %v1089 = vsel %vm1075, %v1070, 0.0
      %v1090 = vadd.f32 %v1088, %v1089
      %1091 = vadd.xlane.f32.xlu0 %v1090
      %v1092 = vpop.xlane.xlu0 %1091
      %v1093 = vld [vmem:[#allocation3] sm:$0xff]
      %v1094 = vld [vmem:[#allocation3 + $0x8] sm:$0xff]
      %v1095 = vld [vmem:[#allocation3 + $0x10] sm:$0xff]
      %v1096 = vld [vmem:[#allocation3 + $0x18] sm:$0xff]
      %v1101 = vcombine.high %v1093, %v1093
      %v1102 = vcombine.high %v1094, %v1094
      %v1103 = vcombine.high %v1095, %v1095
      %v1104 = vcombine.high %v1096, %v1096
      %v1109 = vsel %vm1075, %v1093, 0.0
      %v1110 = vsel %vm1075, %v1101, 0.0
      %v1111 = vadd.f32 %v1109, %v1110
      %v1112 = vsel %vm1075, %v1094, 0.0
      %v1113 = vadd.f32 %v1111, %v1112
      %v1114 = vsel %vm1075, %v1102, 0.0
      %v1115 = vadd.f32 %v1113, %v1114
      %v1116 = vsel %vm1075, %v1095, 0.0
      %v1117 = vadd.f32 %v1115, %v1116
      %v1118 = vsel %vm1075, %v1103, 0.0
      %v1119 = vadd.f32 %v1117, %v1118
      %v1120 = vsel %vm1075, %v1096, 0.0
      %v1121 = vadd.f32 %v1119, %v1120
      %v1122 = vsel %vm1075, %v1104, 0.0
      %v1123 = vadd.f32 %v1121, %v1122
      %1124 = vadd.xlane.f32.xlu0 %v1123
      %v1125 = vpop.xlane.xlu0 %1124
      %v1126 = vadd.f32 %v1092, 0.5
      %v1127 = vadd.f32 %v1125, 1.0
      %v1128 = vrcp.pop %v1127
      %v1129 = vmul.f32 %v1126, %v1128
      %v1130 = vlog2.pop %v1129
      %v1131 = vmul.f32 %v1130, 0.6931472
      %v1132 = vsub.f32 1.0, %v1129
      %v1133 = vlog2.pop %v1132
      %v1134 = vmul.f32 %v1133, 0.6931472
      %v1135 = vld [vmem:[%s2] sm:$0xf]
      %v1136 = vmul.f32 %v1135, %v1131
      %vm1137 = vcmask 11264
      %v1138 = vsel %vm1137, %v1136, 0.0
      %v1139 = vrot.slane %v1138, 4
      %v1140 = vadd.f32 %v1138, %v1139
      %v1141 = vrot.slane %v1140, 2
      %v1142 = vadd.f32 %v1140, %v1141
      %v1143 = vrot.slane %v1142, 1
      %v1144 = vadd.f32 %v1142, %v1143
      %v1145 = vmul.f32 %v1135, %v1134
      %v1146 = vsel %vm1137, %v1145, 0.0
      %v1147 = vrot.slane %v1146, 4
      %v1148 = vadd.f32 %v1146, %v1147
      %v1149 = vrot.slane %v1148, 2
      %v1150 = vadd.f32 %v1148, %v1149
      %v1151 = vrot.slane %v1150, 1
      %v1152 = vadd.f32 %v1150, %v1151
      %v1153 = vand.u32 2147483647, %v1144
      %v1154 = vand.u32 2147483647, %v1152
      %v1155 = vmax.f32 %v1153, %v1154
      %vm1156 = vcmask 8192
      %1157 = vst.msk [vmem:[#allocation9] sm:$0x1] %vm1156, %v1155
    $region29: #{tpu_custom_call.1} parent=1 // pred_fallthru
      _
    // Predicated region
    $region30: #{tpu_custom_call.1} parent=1 // pred_check
      _
    $region31: #{tpu_custom_call.1} parent=1 // pred_check_branch
      %1159 = sbr.rel (0) target = $region33
    $region32: #{tpu_custom_call.1} parent=1 // pred_region
      %s1161 = ssub.s32 16, 16
      %1162 = vsyncadd [#allocation6], %s1161
      %s1164 = sshll.u32 [#allocation9], 4
      %s1165 = int_to_ptr.vmem [resolvable:$true] %s1164
      %1167 = dma.vmem_to_hbm [thread:$0]  %s1165, 16, %s3, [#allocation6]
    $region33: #{tpu_custom_call.1} parent=1 // pred_fallthru
      _
    // Predicated region
    $region34: #{tpu_custom_call.1} parent=1 // pred_check
      _
    $region35: #{tpu_custom_call.1} parent=1 // pred_check_branch
      %1169 = sbr.rel (0) target = $region37
    $region36: #{tpu_custom_call.1} parent=1 // pred_region
      %1170 = dma.done [#allocation6], 16
    $region37: #{tpu_custom_call.1} parent=1 // pred_fallthru
      _
    %1171 = vsyncpa [#allocation5], 1
    %1172 = vsyncpa [#allocation8], 1
    %1173 = vsyncpa [#allocation6], 1

</llo_original>
